<compile_context>
chip_gen: v5e
topology: v5e:2x2
jax: 0.10.0
libtpu: 0.0.40
codegen_flags: <defaults>
</compile_context>

<pallas_src>
import jax
import jax.numpy as jnp
from jax.experimental import pallas as pl
from jax.experimental.pallas import tpu as pltpu


def _concat_dma_kernel(*refs):
    """refs = (in_0, ..., in_{k-1}, out, dma_sems).

    All refs live in HBM.  Each input i, flattened to (N, L_i), is copied by
    one async DMA directly into its static slice of the flattened output
    (N, L_total).  All DMAs are started up front so they overlap, then we wait
    on all of them.  No VMEM staging, no vector-slot work: pure HBM->HBM data
    movement, which is the bandwidth floor for a concat.
    """
    n_in = len(refs) - 2
    in_refs = refs[:n_in]
    out_ref = refs[n_in]
    sems = refs[n_in + 1]

    copies = []
    off = 0
    for i, r in enumerate(in_refs):
        length = r.shape[1]
        cp = pltpu.make_async_copy(r, out_ref.at[:, off:off + length], sems.at[i])
        cp.start()
        copies.append(cp)
        off += length
    for cp in copies:
        cp.wait()


def concat_channels_pallas(tensors):
    """Concatenate a sequence of NCHW arrays along axis 1 (channels)."""
    tensors = tuple(tensors)
    assert len(tensors) >= 1
    N, _, H, W = tensors[0].shape
    dtype = tensors[0].dtype
    for t in tensors:
        assert t.ndim == 4 and t.shape[0] == N and t.shape[2:] == (H, W)
        assert t.dtype == dtype
    channels = [int(t.shape[1]) for t in tensors]
    c_total = sum(channels)

    if len(tensors) == 1:
        return tensors[0]

    # Flatten each contiguous NCHW input to (N, C_i*H*W) — a free metadata
    # reshape.  Channel concat then becomes a last-axis concat: each input is
    # a per-batch contiguous span of the output, exactly what a strided
    # HBM->HBM DMA handles natively (no (8,128) / lane-alignment constraints).
    flats = [t.reshape(N, c * H * W) for t, c in zip(tensors, channels)]

    out_flat = pl.pallas_call(
        _concat_dma_kernel,
        out_shape=jax.ShapeDtypeStruct((N, c_total * H * W), dtype),
        in_specs=[pl.BlockSpec(memory_space=pl.ANY) for _ in flats],
        out_specs=pl.BlockSpec(memory_space=pl.ANY),
        scratch_shapes=[pltpu.SemaphoreType.DMA((len(flats),))],
    )(*flats)

    return out_flat.reshape(N, c_total, H, W)


class SingleBlock:
    """JAX/Pallas port of the PyTorch SingleBlock module.

    forward(outputs) == torch.cat(outputs[self.endpoint], dim=1)
    `outputs` is a mapping (or list) whose entry at `endpoint` is a sequence
    of NCHW arrays to be concatenated along the channel axis.
    """

    def __init__(self, endpoint, min_pallas_bytes=1 << 20):
        self.endpoint = endpoint
        # Below this total size, pallas_call launch/pipeline overhead dwarfs
        # the copy itself; fall back to XLA's native concat.
        self.min_pallas_bytes = min_pallas_bytes

    def calc_output_size(self, dimensions):
        return dimensions[self.endpoint]

    def forward(self, outputs):
        tensors = tuple(outputs[self.endpoint])
        total_bytes = sum(int(t.size) * t.dtype.itemsize for t in tensors)
        if total_bytes < self.min_pallas_bytes or len(tensors) == 1:
            return jnp.concatenate(tensors, axis=1)
        return concat_channels_pallas(tensors)

    __call__ = forward


if __name__ == "__main__":
    key = jax.random.PRNGKey(0)
    k1, k2, k3 = jax.random.split(key, 3)

    # Small NCHW feature maps with differing channel counts, as a backbone
    # endpoint would produce.
    N, H, W = 2, 16, 16
    x1 = jax.random.normal(k1, (N, 4, H, W), dtype=jnp.float32)
    x2 = jax.random.normal(k2, (N, 6, H, W), dtype=jnp.float32)
    x3 = jax.random.normal(k3, (N, 2, H, W), dtype=jnp.float32)

    outputs = {"stage3": (x1, x2, x3)}

    # min_pallas_bytes=0 forces the Pallas DMA path even at these toy sizes so
    # the kernel itself is exercised; in production the default threshold
    # would route tiny concats to jnp.concatenate.
    block = SingleBlock("stage3", min_pallas_bytes=0)

    result = block(outputs)
    result = jax.block_until_ready(result)

    # Reference check against plain-JAX concatenation (== torch.cat dim=1).
    ref = jnp.concatenate([x1, x2, x3], axis=1)
    assert result.shape == (N, 4 + 6 + 2, H, W)
    assert result.dtype == ref.dtype
    assert jnp.array_equal(result, ref)

    print("KERNEL_OK")
</pallas_src>

<mosaic_0001>
module attributes {stable_mosaic.version = 11 : i64} {
  func.func @_concat_dma_kernel(%arg0: memref<2x1024xf32, #tpu.memory_space<any>>, %arg1: memref<2x1536xf32, #tpu.memory_space<any>>, %arg2: memref<2x512xf32, #tpu.memory_space<any>>, %arg3: memref<2x3072xf32, #tpu.memory_space<any>>, %arg4: memref<3x!tpu.dma_semaphore, #tpu.memory_space<semaphore_mem>>) attributes {dimension_semantics = [], scalar_prefetch = 0 : i64, scratch_operands = 1 : i64, tpu.core_type = #tpu.core_type<tc>} {
    %c0_i32 = arith.constant 0 : i32
    %c0_i32_0 = arith.constant 0 : i32
    %c0_i32_1 = arith.constant 0 : i32
    %0 = tpu.memref_slice %arg3[%c0_i32_0, %c0_i32_1] : memref<2x3072xf32, #tpu.memory_space<any>> -> memref<2x1024xf32, #tpu.memory_space<any>>
    %1 = tpu.memref_slice %arg4[%c0_i32] : memref<3x!tpu.dma_semaphore, #tpu.memory_space<semaphore_mem>> -> memref<1x!tpu.dma_semaphore, #tpu.memory_space<semaphore_mem>>
    %2 = tpu.memref_squeeze %1 : memref<1x!tpu.dma_semaphore, #tpu.memory_space<semaphore_mem>> -> memref<!tpu.dma_semaphore, #tpu.memory_space<semaphore_mem>>
    tpu.enqueue_dma source(%arg0 : memref<2x1024xf32, #tpu.memory_space<any>>) target(%0 : memref<2x1024xf32, #tpu.memory_space<any>>) target_semaphore(%2 : memref<!tpu.dma_semaphore, #tpu.memory_space<semaphore_mem>>)
    %c1_i32 = arith.constant 1 : i32
    %c0_i32_2 = arith.constant 0 : i32
    %c1024_i32 = arith.constant 1024 : i32
    %3 = tpu.memref_slice %arg3[%c0_i32_2, %c1024_i32] : memref<2x3072xf32, #tpu.memory_space<any>> -> memref<2x1536xf32, #tpu.memory_space<any>>
    %4 = tpu.memref_slice %arg4[%c1_i32] : memref<3x!tpu.dma_semaphore, #tpu.memory_space<semaphore_mem>> -> memref<1x!tpu.dma_semaphore, #tpu.memory_space<semaphore_mem>>
    %5 = tpu.memref_squeeze %4 : memref<1x!tpu.dma_semaphore, #tpu.memory_space<semaphore_mem>> -> memref<!tpu.dma_semaphore, #tpu.memory_space<semaphore_mem>>
    tpu.enqueue_dma source(%arg1 : memref<2x1536xf32, #tpu.memory_space<any>>) target(%3 : memref<2x1536xf32, #tpu.memory_space<any>>) target_semaphore(%5 : memref<!tpu.dma_semaphore, #tpu.memory_space<semaphore_mem>>)
    %c2_i32 = arith.constant 2 : i32
    %c0_i32_3 = arith.constant 0 : i32
    %c2560_i32 = arith.constant 2560 : i32
    %6 = tpu.memref_slice %arg3[%c0_i32_3, %c2560_i32] : memref<2x3072xf32, #tpu.memory_space<any>> -> memref<2x512xf32, #tpu.memory_space<any>>
    %7 = tpu.memref_slice %arg4[%c2_i32] : memref<3x!tpu.dma_semaphore, #tpu.memory_space<semaphore_mem>> -> memref<1x!tpu.dma_semaphore, #tpu.memory_space<semaphore_mem>>
    %8 = tpu.memref_squeeze %7 : memref<1x!tpu.dma_semaphore, #tpu.memory_space<semaphore_mem>> -> memref<!tpu.dma_semaphore, #tpu.memory_space<semaphore_mem>>
    tpu.enqueue_dma source(%arg2 : memref<2x512xf32, #tpu.memory_space<any>>) target(%6 : memref<2x512xf32, #tpu.memory_space<any>>) target_semaphore(%8 : memref<!tpu.dma_semaphore, #tpu.memory_space<semaphore_mem>>)
    %c0_i32_4 = arith.constant 0 : i32
    %c0_i32_5 = arith.constant 0 : i32
    %c0_i32_6 = arith.constant 0 : i32
    %9 = tpu.memref_slice %arg3[%c0_i32_5, %c0_i32_6] : memref<2x3072xf32, #tpu.memory_space<any>> -> memref<2x1024xf32, #tpu.memory_space<any>>
    %10 = tpu.memref_slice %arg4[%c0_i32_4] : memref<3x!tpu.dma_semaphore, #tpu.memory_space<semaphore_mem>> -> memref<1x!tpu.dma_semaphore, #tpu.memory_space<semaphore_mem>>
    %11 = tpu.memref_squeeze %10 : memref<1x!tpu.dma_semaphore, #tpu.memory_space<semaphore_mem>> -> memref<!tpu.dma_semaphore, #tpu.memory_space<semaphore_mem>>
    tpu.wait_dma2 semaphore(%11 : memref<!tpu.dma_semaphore, #tpu.memory_space<semaphore_mem>>) src(%arg0 : memref<2x1024xf32, #tpu.memory_space<any>>) dst(%9 : memref<2x1024xf32, #tpu.memory_space<any>>)
    %c1_i32_7 = arith.constant 1 : i32
    %c0_i32_8 = arith.constant 0 : i32
    %c1024_i32_9 = arith.constant 1024 : i32
    %12 = tpu.memref_slice %arg3[%c0_i32_8, %c1024_i32_9] : memref<2x3072xf32, #tpu.memory_space<any>> -> memref<2x1536xf32, #tpu.memory_space<any>>
    %13 = tpu.memref_slice %arg4[%c1_i32_7] : memref<3x!tpu.dma_semaphore, #tpu.memory_space<semaphore_mem>> -> memref<1x!tpu.dma_semaphore, #tpu.memory_space<semaphore_mem>>
    %14 = tpu.memref_squeeze %13 : memref<1x!tpu.dma_semaphore, #tpu.memory_space<semaphore_mem>> -> memref<!tpu.dma_semaphore, #tpu.memory_space<semaphore_mem>>
    tpu.wait_dma2 semaphore(%14 : memref<!tpu.dma_semaphore, #tpu.memory_space<semaphore_mem>>) src(%arg1 : memref<2x1536xf32, #tpu.memory_space<any>>) dst(%12 : memref<2x1536xf32, #tpu.memory_space<any>>)
    %c2_i32_10 = arith.constant 2 : i32
    %c0_i32_11 = arith.constant 0 : i32
    %c2560_i32_12 = arith.constant 2560 : i32
    %15 = tpu.memref_slice %arg3[%c0_i32_11, %c2560_i32_12] : memref<2x3072xf32, #tpu.memory_space<any>> -> memref<2x512xf32, #tpu.memory_space<any>>
    %16 = tpu.memref_slice %arg4[%c2_i32_10] : memref<3x!tpu.dma_semaphore, #tpu.memory_space<semaphore_mem>> -> memref<1x!tpu.dma_semaphore, #tpu.memory_space<semaphore_mem>>
    %17 = tpu.memref_squeeze %16 : memref<1x!tpu.dma_semaphore, #tpu.memory_space<semaphore_mem>> -> memref<!tpu.dma_semaphore, #tpu.memory_space<semaphore_mem>>
    tpu.wait_dma2 semaphore(%17 : memref<!tpu.dma_semaphore, #tpu.memory_space<semaphore_mem>>) src(%arg2 : memref<2x512xf32, #tpu.memory_space<any>>) dst(%15 : memref<2x512xf32, #tpu.memory_space<any>>)
    return
  }
}

</mosaic_0001>

<llo_original>
// kernel: tpu_custom_call.1
$region0: #{tpu_custom_call.1}
  #allocation0 [shape = 'u32[]', space=smem, size = 0x4, offset = 0x4, fixed_abs, tag = 'smem constant byte address 0x4 - core index']
  #allocation1 [shape = 'u32[72,128]{1,0:T(1,128)}', space=vmem, size = 0x9000, scoped, tag = 'internal scratch']
  #allocation2 [shape = 's32[3]{0}', space=sflag, size = 0xc, scoped, tag = 'scratch operand']
  #allocation3 [shape = 's32[]', space=sflag, size = 0x4, offset = 0, fixed_abs, tag = 'sflag constant byte address 0x0 - dummy sync flag']
  #allocation4 [shape = 'u32[0]{0}', space=smem, size = 0, offset = 0, fixed_abs, tag = 'smem constant byte address 0x0 - null']
  #allocation5 [shape = 's32[]', space=sflag, size = 0x4, offset = 0, fixed_abs, tag = 'sflag constant byte address 0x0 - dummy sync flag']
  #allocation6 [shape = 'u32[0]{0}', space=smem, size = 0, offset = 0, fixed_abs, tag = 'smem constant byte address 0x0 - null']
  #allocation7 [shape = 's32[]', space=sflag, size = 0x4, offset = 0, fixed_abs, tag = 'sflag constant byte address 0x0 - dummy sync flag']
  #allocation8 [shape = 'u32[0]{0}', space=smem, size = 0, offset = 0, fixed_abs, tag = 'smem constant byte address 0x0 - null']
  %s0 = inlined_call_operand.hbm [shape: f32[2,1024], index: 0, kind: input, shape index: {}]
  %s1 = inlined_call_operand.hbm [shape: f32[2,1536], index: 1, kind: input, shape index: {}]
  %s2 = inlined_call_operand.hbm [shape: f32[2,512], index: 2, kind: input, shape index: {}]
  %s3 = inlined_call_operand.hbm [shape: f32[2,3072], index: 3, kind: output, shape index: {}]
  %s4 = sld [smem:[#allocation0]]
  $region2: #{tpu_custom_call.1} parent=0
    _
  %s6 = ssub.s32 1, %s4
  %s7 = scalar_select 0, %s6, %s4
  %s9 = sshll.u32 1, 14
  %s10 = sxor.u32 4294967295, %s9
  %s12 = sshll.u32 %s0, 4
  %s13 = int_to_ptr.hbm [resolvable:$true] %s12
  %s14 = sshll.u32 %s3, 4
  %s15 = int_to_ptr.hbm [resolvable:$true] %s14
  %18 = dma.general %s13, 256, %s15, [#allocation2], [#allocation3], [#allocation4], 0, 0
  %s19 = scalar_lea.hbm %s3, 16
  %s20 = scalar_lea.sflag [#allocation2], 1
  %s22 = sshll.u32 1, 14
  %s23 = sxor.u32 4294967295, %s22
  %s25 = sshll.u32 %s1, 4
  %s26 = int_to_ptr.hbm [resolvable:$true] %s25
  %s27 = sshll.u32 %s19, 4
  %s28 = int_to_ptr.hbm [resolvable:$true] %s27
  %31 = dma.general %s26, 384, %s28, %s20, [#allocation5], [#allocation6], 0, 0
  %s32 = scalar_lea.hbm %s3, 40
  %s33 = scalar_lea.sflag [#allocation2], 2
  %s35 = sshll.u32 1, 14
  %s36 = sxor.u32 4294967295, %s35
  %s38 = sshll.u32 %s2, 4
  %s39 = int_to_ptr.hbm [resolvable:$true] %s38
  %s40 = sshll.u32 %s32, 4
  %s41 = int_to_ptr.hbm [resolvable:$true] %s40
  %44 = dma.general %s39, 128, %s41, %s33, [#allocation7], [#allocation8], 0, 0
  %s45 = smul.u32 2, 1
  %s46 = smul.u32 %s45, 8
  %s47 = sshll.u32 %s46, 4
  %48 = dma.done [#allocation2], %s47
  %s49 = smul.u32 %s45, 12
  %s50 = sshll.u32 %s49, 4
  %51 = dma.done %s20, %s50
  %s52 = smul.u32 %s45, 4
  %s53 = sshll.u32 %s52, 4
  %54 = dma.done %s33, %s53
  %55 = vsyncmov [#allocation2]
  %s56 = vpop.sfrf %55
  %p57 = scmp.eq.s32.totalorder %s56, 0
  %p58 = pneg %p57
  %60 = shalt.err (%p58)
  %s61 = scalar_lea.sflag [#allocation2], 1
  %62 = vsyncmov %s61
  %s63 = vpop.sfrf %62
  %p64 = scmp.eq.s32.totalorder %s63, 0
  %p65 = pneg %p64
  %67 = shalt.err (%p65)
  %s68 = scalar_lea.sflag [#allocation2], 2
  %69 = vsyncmov %s68
  %s70 = vpop.sfrf %69
  %p71 = scmp.eq.s32.totalorder %s70, 0
  %p72 = pneg %p71
  %74 = shalt.err (%p72)

</llo_original>
